<compile_context>
chip_gen: v5e
topology: v5e:2x2
jax: 0.10.0
libtpu: 0.0.40
codegen_flags: <defaults>
</compile_context>

<pallas_src>
import jax
import jax.numpy as jnp
from jax.experimental import pallas as pl
from jax.experimental.pallas import tpu as pltpu


def mm_cat_kernel(x1_ref, x2_ref, o_ref):
    a = x1_ref[...].astype(jnp.float32)   # (M, K)
    b = x2_ref[...].astype(jnp.float32)   # (K, N)
    M, K = a.shape
    _, N = b.shape

    # Matmul via unrolled broadcast-MAC on the VPU (K is tiny and static).
    # TODO(synk): for MXU-scale shapes replace with jnp.dot + K-grid accumulator.
    mm = jnp.zeros((M, N), dtype=jnp.float32)
    for k in range(K):
        mm = mm + a[:, k:k + 1] * b[k:k + 1, :]

    # v1 == v2 (identical inputs), so cat([v1, v2, v2], dim=1) is mm tiled 3x
    # along columns.  Build the replicated tile in-register and issue a single
    # full-block store (one unmasked-as-possible vst instead of 3 masked ones).
    out_tile = jnp.concatenate([mm, mm, mm], axis=1)   # (M, 3*N)
    o_ref[...] = out_tile.astype(o_ref.dtype)


def model_forward(x1, x2):
    M, K = x1.shape
    K2, N = x2.shape
    assert K == K2
    return pl.pallas_call(
        mm_cat_kernel,
        out_shape=jax.ShapeDtypeStruct((M, 3 * N), jnp.float32),
        in_specs=[
            pl.BlockSpec((M, K), lambda: (0, 0), memory_space=pltpu.VMEM),
            pl.BlockSpec((K, N), lambda: (0, 0), memory_space=pltpu.VMEM),
        ],
        out_specs=pl.BlockSpec((M, 3 * N), lambda: (0, 0),
                               memory_space=pltpu.VMEM),
    )(x1, x2)


if __name__ == "__main__":
    key = jax.random.PRNGKey(0)
    k1, k2 = jax.random.split(key)
    # Same shapes as the PyTorch script: x1 = randn(1, 2), x2 = randn(2, 2)
    x1 = jax.random.normal(k1, (1, 2), dtype=jnp.float32)
    x2 = jax.random.normal(k2, (2, 2), dtype=jnp.float32)

    out = model_forward(x1, x2)
    out = jax.block_until_ready(out)

    # Reference check against plain JAX (torch.mm + torch.cat semantics).
    v = x1 @ x2
    ref = jnp.concatenate([v, v, v], axis=1)
    assert out.shape == (1, 6)
    assert jnp.allclose(out, ref, atol=1e-5, rtol=1e-5)

    print("KERNEL_OK")
</pallas_src>

<mosaic_0001>
module attributes {stable_mosaic.version = 11 : i64} {
  func.func @mm_cat_kernel(%arg0: memref<1x2xf32, #tpu.memory_space<vmem>>, %arg1: memref<2x2xf32, #tpu.memory_space<vmem>>, %arg2: memref<1x6xf32, #tpu.memory_space<vmem>>) attributes {dimension_semantics = [], scalar_prefetch = 0 : i64, scratch_operands = 0 : i64, tpu.core_type = #tpu.core_type<tc>} {
    %c0 = arith.constant 0 : index
    %c0_0 = arith.constant 0 : index
    %0 = vector.load %arg0[%c0, %c0_0] : memref<1x2xf32, #tpu.memory_space<vmem>>, vector<1x2xf32>
    %c0_1 = arith.constant 0 : index
    %c0_2 = arith.constant 0 : index
    %1 = vector.load %arg1[%c0_1, %c0_2] : memref<2x2xf32, #tpu.memory_space<vmem>>, vector<2x2xf32>
    %cst = arith.constant 0.000000e+00 : f32
    %2 = vector.broadcast %cst : f32 to vector<1x2xf32>
    %3 = vector.extract_strided_slice %0 {offsets = [0, 0], sizes = [1, 1], strides = [1, 1]} : vector<1x2xf32> to vector<1x1xf32>
    %4 = vector.extract_strided_slice %1 {offsets = [0, 0], sizes = [1, 2], strides = [1, 1]} : vector<2x2xf32> to vector<1x2xf32>
    %5 = vector.broadcast %3 : vector<1x1xf32> to vector<1x2xf32>
    %6 = arith.mulf %5, %4 : vector<1x2xf32>
    %7 = arith.addf %2, %6 : vector<1x2xf32>
    %8 = vector.extract_strided_slice %0 {offsets = [0, 1], sizes = [1, 1], strides = [1, 1]} : vector<1x2xf32> to vector<1x1xf32>
    %9 = vector.extract_strided_slice %1 {offsets = [1, 0], sizes = [1, 2], strides = [1, 1]} : vector<2x2xf32> to vector<1x2xf32>
    %10 = vector.broadcast %8 : vector<1x1xf32> to vector<1x2xf32>
    %11 = arith.mulf %10, %9 : vector<1x2xf32>
    %12 = arith.addf %7, %11 : vector<1x2xf32>
    %13 = tpu.concatenate %12, %12, %12 in 1 : vector<1x2xf32>, vector<1x2xf32>, vector<1x2xf32> -> vector<1x6xf32>
    %c0_3 = arith.constant 0 : index
    %c0_4 = arith.constant 0 : index
    %14 = vector.load %arg2[%c0_3, %c0_4] : memref<1x6xf32, #tpu.memory_space<vmem>>, vector<1x6xf32>
    tpu.vector_store %arg2[%c0_3, %c0_4], %13 {strides = array<i32>} : memref<1x6xf32, #tpu.memory_space<vmem>>, vector<1x6xf32>,
    return
  }
}

</mosaic_0001>

<llo_original>
// kernel: tpu_custom_call.1
$region0: #{tpu_custom_call.1}
  #allocation0 [shape = 'u32[]', space=smem, size = 0x4, offset = 0x4, fixed_abs, tag = 'smem constant byte address 0x4 - core index']
  #allocation1 [shape = 'u32[72,128]{1,0:T(1,128)}', space=vmem, size = 0x9000, scoped, tag = 'internal scratch']
  %s0 = inlined_call_operand.hbm [shape: f32[1,2], index: 0, kind: input, shape index: {}]
  %s1 = inlined_call_operand.hbm [shape: f32[2,2], index: 1, kind: input, shape index: {}]
  %s2 = inlined_call_operand.hbm [shape: f32[1,6], index: 2, kind: output, shape index: {}]
  %s3 = sld [smem:[#allocation0]]
  $region26: #{tpu_custom_call.1} parent=0
    _
  %s5 = ssub.s32 1, %s3
  %s6 = scalar_select 0, %s5, %s3
  $region1: #{tpu_custom_call.1} parent=0
    #allocation2 [shape = 'u8[512]{0}', space=vmem, size = 0x400, scoped, tag = 'input window, operand 0, single buffered']
    #allocation3 [shape = 's32[1]{0}', space=sflag, size = 0x4, scoped, tag = 'scoped memory for tpu_custom_call.1']
    #allocation4 [shape = 's32[1]{0}', space=sflag, size = 0x4, scoped, tag = 'scoped memory for tpu_custom_call.1']
    #allocation5 [shape = 'u8[1024]{0}', space=vmem, size = 0x400, scoped, tag = 'input window, operand 1, single buffered']
    #allocation6 [shape = 's32[1]{0}', space=sflag, size = 0x4, scoped, tag = 'scoped memory for tpu_custom_call.1']
    #allocation7 [shape = 'u8[512]{0}', space=vmem, size = 0x400, scoped, tag = 'output window, operand 0, single buffered']
    %7 = vsyncpa [#allocation3], 0
    %8 = vsyncpa [#allocation6], 0
    %9 = vsyncpa [#allocation4], 0
    // Predicated region
    $region2: #{tpu_custom_call.1} parent=1 // pred_check
      _
    $region3: #{tpu_custom_call.1} parent=1 // pred_check_branch
      %11 = sbr.rel (0) target = $region5
    $region4: #{tpu_custom_call.1} parent=1 // pred_region
      %13 = vsyncadd [#allocation3], 0
      %s15 = sshll.u32 %s0, 4
      %s16 = int_to_ptr.hbm [resolvable:$true] %s15
      %s17 = sshll.u32 [#allocation2], 4
      %s18 = int_to_ptr.vmem [resolvable:$true] %s17
      %20 = dma.hbm_to_vmem [thread:$0]  %s16, 16, %s18, [#allocation3]
    $region5: #{tpu_custom_call.1} parent=1 // pred_fallthru
      _
    // Predicated region
    $region6: #{tpu_custom_call.1} parent=1 // pred_check
      _
    $region7: #{tpu_custom_call.1} parent=1 // pred_check_branch
      %22 = sbr.rel (0) target = $region9
    $region8: #{tpu_custom_call.1} parent=1 // pred_region
      %24 = vsyncadd [#allocation6], 0
      %s26 = sshll.u32 %s1, 4
      %s27 = int_to_ptr.hbm [resolvable:$true] %s26
      %s28 = sshll.u32 [#allocation5], 4
      %s29 = int_to_ptr.vmem [resolvable:$true] %s28
      %31 = dma.hbm_to_vmem [thread:$0]  %s27, 32, %s29, [#allocation6]
    $region9: #{tpu_custom_call.1} parent=1 // pred_fallthru
      _
    // Predicated region
    $region10: #{tpu_custom_call.1} parent=1 // pred_check
      _
    $region11: #{tpu_custom_call.1} parent=1 // pred_check_branch
      %33 = sbr.rel (0) target = $region13
    $region12: #{tpu_custom_call.1} parent=1 // pred_region
      %35 = dma.done [#allocation3], 16
    $region13: #{tpu_custom_call.1} parent=1 // pred_fallthru
      _
    // Predicated region
    $region14: #{tpu_custom_call.1} parent=1 // pred_check
      _
    $region15: #{tpu_custom_call.1} parent=1 // pred_check_branch
      %37 = sbr.rel (0) target = $region17
    $region16: #{tpu_custom_call.1} parent=1 // pred_region
      %39 = dma.done [#allocation6], 32
    $region17: #{tpu_custom_call.1} parent=1 // pred_fallthru
      _
    %v40 = vld [vmem:[#allocation2] sm:$0x1]
    %v41 = vld [vmem:[#allocation5] sm:$0x3]
    %43 = vset.pattern.permute.xlu0 0
    %44 = vperm.xlu0 %43, %v40
    %v45 = vpop.permute.xlu0 %44
    %v47 = vperm.slane %v45, 0
    %v48 = vmul.f32 %v47, %v41
    %v49 = vadd.f32 %v48, 0.0
    %50 = vset.pattern.permute.xlu0 1
    %51 = vperm.xlu0 %50, %v40
    %v52 = vpop.permute.xlu0 %51
    %v54 = vperm.slane %v52, 0
    %v55 = vmul.f32 %v54, %v41
    %v57 = vrot.slane %v55, 1
    %v59 = vadd.f32 %v49, %v57
    %61 = vrot.lane.b32.xlu0 %v59, 2
    %v62 = vpop.permute.xlu0 %61
    %64 = vrot.lane.b32.xlu0 %v59, 4
    %v65 = vpop.permute.xlu0 %64
    %vm67 = vcmask 15360
    %v68 = vsel %vm67, %v59, %v62
    %vm69 = vcmask 31744
    %v70 = vsel %vm69, %v68, %v65
    %vm71 = vcmask 40960
    %72 = vst.msk [vmem:[#allocation7] sm:$0x1] %vm71, %v70
    // Predicated region
    $region18: #{tpu_custom_call.1} parent=1 // pred_check
      _
    $region19: #{tpu_custom_call.1} parent=1 // pred_check_branch
      %74 = sbr.rel (0) target = $region21
    $region20: #{tpu_custom_call.1} parent=1 // pred_region
      %76 = vsyncadd [#allocation4], 0
      %s78 = sshll.u32 [#allocation7], 4
      %s79 = int_to_ptr.vmem [resolvable:$true] %s78
      %s80 = sshll.u32 %s2, 4
      %s81 = int_to_ptr.hbm [resolvable:$true] %s80
      %83 = dma.vmem_to_hbm [thread:$0]  %s79, 16, %s81, [#allocation4]
    $region21: #{tpu_custom_call.1} parent=1 // pred_fallthru
      _
    // Predicated region
    $region22: #{tpu_custom_call.1} parent=1 // pred_check
      _
    $region23: #{tpu_custom_call.1} parent=1 // pred_check_branch
      %85 = sbr.rel (0) target = $region25
    $region24: #{tpu_custom_call.1} parent=1 // pred_region
      %87 = dma.done [#allocation4], 16
    $region25: #{tpu_custom_call.1} parent=1 // pred_fallthru
      _
    %88 = vsyncpa [#allocation3], 1
    %89 = vsyncpa [#allocation6], 1
    %90 = vsyncpa [#allocation4], 1

</llo_original>
